<compile_context>
chip_gen: v6e
topology: v6e:2x2x1
jax: 0.10.0
libtpu: 0.0.40
codegen_flags: <defaults>
</compile_context>

<pallas_src>
import jax
import jax.numpy as jnp
from jax.experimental import pallas as pl
from jax.experimental.pallas import tpu as pltpu


def _mlp_kernel(x_ref, w0_ref, b0_ref, wh_ref, bh_ref, w5_ref, b5_ref, o_ref):
    # x_ref: (1, TB)  -- batch on lanes
    # w0_ref: (NN, 1), b0_ref: (NN, 1)
    # wh_ref: (4, NN, NN), bh_ref: (4, NN, 1)   (PyTorch (out, in) layout)
    # w5_ref: (NN, 1), b5_ref: (1, 1)
    # o_ref: (1, TB)
    x = x_ref[...]                                           # (1, TB)

    # Layer 0: K == 1 -> pure VPU outer product, skip the MXU.
    h = jnp.tanh(w0_ref[...] * x + b0_ref[...])              # (NN,1)*(1,TB) -> (NN, TB)

    # Hidden layers 1..4: lane-dense MXU matmuls, h = tanh(W @ h + b).
    bh = bh_ref[...]                                         # (4, NN, 1) loaded once (hoisted)
    for l in range(4):                                       # unrolled
        h = jnp.tanh(
            jnp.dot(wh_ref[l], h, preferred_element_type=jnp.float32) + bh[l]
        )                                                    # (NN, TB)

    # Output layer: N == 1 -> multiply + sublane reduce (VPU + XLU), skip the MXU.
    out = jnp.sum(w5_ref[...] * h, axis=0, keepdims=True) + b5_ref[...]   # (1, TB)
    o_ref[...] = out.astype(o_ref.dtype)


def net_forward(x, params, *, tb=None):
    """Pallas forward pass of the 6-layer MLP.

    x:      (B, 1) float32.
    params: list of 6 (W, b) pairs in PyTorch nn.Linear layout:
            W shape (out_features, in_features), b shape (out_features,).
    """
    B, in_dim = x.shape
    assert in_dim == 1
    NN = params[0][0].shape[0]

    # Single grid step at small B; otherwise lane-aligned batch tiles.
    if tb is None:
        tb = B if B <= 2048 else 2048
    tb = min(tb, B)
    assert B % tb == 0, "batch must be divisible by the batch tile"
    assert tb == B or tb % 128 == 0, "batch tile must be a multiple of 128 lanes (or the full batch)"

    w0, b0 = params[0]
    w5, b5 = params[5]
    w0c = w0.reshape(NN, 1).astype(jnp.float32)
    b0c = b0.reshape(NN, 1).astype(jnp.float32)
    # Pack the 4 hidden layers into single arrays (fewer DMAs, less VMEM padding).
    wh = jnp.stack([params[i][0] for i in range(1, 5)]).astype(jnp.float32)            # (4, NN, NN)
    bh = jnp.stack([params[i][1].reshape(NN, 1) for i in range(1, 5)]).astype(jnp.float32)  # (4, NN, 1)
    w5c = w5.reshape(1, NN).T.astype(jnp.float32)                                       # (NN, 1)
    b5c = b5.reshape(1, 1).astype(jnp.float32)

    x_t = x.T.astype(jnp.float32)                                                       # (1, B)

    def full_spec(arr):
        nd = arr.ndim
        return pl.BlockSpec(arr.shape, lambda i, _nd=nd: (0,) * _nd)

    n_steps = B // tb
    in_specs = [pl.BlockSpec((1, tb), lambda i: (0, i))] + [
        full_spec(a) for a in (w0c, b0c, wh, bh, w5c, b5c)
    ]
    out_spec = pl.BlockSpec((1, tb), lambda i: (0, i))

    out_t = pl.pallas_call(
        _mlp_kernel,
        out_shape=jax.ShapeDtypeStruct((1, B), jnp.float32),
        grid_spec=pltpu.PrefetchScalarGridSpec(
            num_scalar_prefetch=0,
            grid=(n_steps,),
            in_specs=in_specs,
            out_specs=out_spec,
        ),
        compiler_params=pltpu.CompilerParams(
            dimension_semantics=(("parallel",) if n_steps > 1 else ("arbitrary",))
        ),
    )(x_t, w0c, b0c, wh, bh, w5c, b5c)

    return out_t.T                                                                      # (B, 1)


def init_params(key, nn_dim):
    """PyTorch-layout init mimicking nn.Linear's U(-1/sqrt(fan_in), 1/sqrt(fan_in))."""
    dims = [(1, nn_dim)] + [(nn_dim, nn_dim)] * 4 + [(nn_dim, 1)]
    params = []
    for (fan_in, fan_out) in dims:
        key, kw, kb = jax.random.split(key, 3)
        bound = 1.0 / (fan_in ** 0.5)
        w = jax.random.uniform(kw, (fan_out, fan_in), jnp.float32, -bound, bound)  # (out, in)
        b = jax.random.uniform(kb, (fan_out,), jnp.float32, -bound, bound)
        params.append((w, b))
    return params


def reference_forward(x, params):
    h = x
    for (w, b) in params[:-1]:
        h = jnp.tanh(h @ w.T + b)
    w, b = params[-1]
    return h @ w.T + b


if __name__ == "__main__":
    NN = 32          # hidden width
    B = 128          # number of collocation points (batch); x has 1 feature
    key = jax.random.PRNGKey(0)
    kx, kp = jax.random.split(key)

    x = jax.random.uniform(kx, (B, 1), jnp.float32, -1.0, 1.0)
    params = init_params(kp, NN)

    out = net_forward(x, params)
    out = jax.block_until_ready(out)

    ref = reference_forward(x, params)
    assert out.shape == (B, 1)
    assert jnp.allclose(out, ref, atol=1e-5, rtol=1e-5), "mismatch vs JAX reference"

    print("KERNEL_OK")
</pallas_src>

<mosaic_0001>
module attributes {stable_mosaic.version = 11 : i64} {
  func.func @_mlp_kernel(%arg0: i32, %arg1: memref<1x128xf32, #tpu.memory_space<vmem>>, %arg2: memref<32x1xf32, #tpu.memory_space<vmem>>, %arg3: memref<32x1xf32, #tpu.memory_space<vmem>>, %arg4: memref<4x32x32xf32, #tpu.memory_space<vmem>>, %arg5: memref<4x32x1xf32, #tpu.memory_space<vmem>>, %arg6: memref<32x1xf32, #tpu.memory_space<vmem>>, %arg7: memref<1x1xf32, #tpu.memory_space<vmem>>, %arg8: memref<1x128xf32, #tpu.memory_space<vmem>>) attributes {dimension_semantics = [#tpu.dimension_semantics<arbitrary>], iteration_bounds = array<i64: 1>, scalar_prefetch = 0 : i64, scratch_operands = 0 : i64, tpu.core_type = #tpu.core_type<tc>, window_params = [{transform_indices = @transform_0, window_bounds = array<i64: 1, 128>}, {pipeline_mode = #tpu.pipeline_mode<synchronous>, transform_indices = @transform_1, window_bounds = array<i64: 32, 1>}, {pipeline_mode = #tpu.pipeline_mode<synchronous>, transform_indices = @transform_2, window_bounds = array<i64: 32, 1>}, {pipeline_mode = #tpu.pipeline_mode<synchronous>, transform_indices = @transform_3, window_bounds = array<i64: 4, 32, 32>}, {pipeline_mode = #tpu.pipeline_mode<synchronous>, transform_indices = @transform_4, window_bounds = array<i64: 4, 32, 1>}, {pipeline_mode = #tpu.pipeline_mode<synchronous>, transform_indices = @transform_5, window_bounds = array<i64: 32, 1>}, {pipeline_mode = #tpu.pipeline_mode<synchronous>, transform_indices = @transform_6, window_bounds = array<i64: 1, 1>}, {transform_indices = @transform_7, window_bounds = array<i64: 1, 128>}]} {
    %c0 = arith.constant 0 : index
    %c0_0 = arith.constant 0 : index
    %0 = vector.load %arg1[%c0, %c0_0] : memref<1x128xf32, #tpu.memory_space<vmem>>, vector<1x128xf32>
    %c0_1 = arith.constant 0 : index
    %c0_2 = arith.constant 0 : index
    %1 = vector.load %arg2[%c0_1, %c0_2] : memref<32x1xf32, #tpu.memory_space<vmem>>, vector<32x1xf32>
    %2 = vector.broadcast %1 : vector<32x1xf32> to vector<32x128xf32>
    %3 = vector.broadcast %0 : vector<1x128xf32> to vector<32x128xf32>
    %4 = arith.mulf %2, %3 : vector<32x128xf32>
    %c0_3 = arith.constant 0 : index
    %c0_4 = arith.constant 0 : index
    %5 = vector.load %arg3[%c0_3, %c0_4] : memref<32x1xf32, #tpu.memory_space<vmem>>, vector<32x1xf32>
    %6 = vector.broadcast %5 : vector<32x1xf32> to vector<32x128xf32>
    %7 = arith.addf %4, %6 : vector<32x128xf32>
    %8 = math.tanh %7 : vector<32x128xf32>
    %c0_5 = arith.constant 0 : index
    %c0_6 = arith.constant 0 : index
    %c0_7 = arith.constant 0 : index
    %9 = vector.load %arg5[%c0_5, %c0_6, %c0_7] : memref<4x32x1xf32, #tpu.memory_space<vmem>>, vector<4x32x1xf32>
    %c0_8 = arith.constant 0 : index
    %c0_9 = arith.constant 0 : index
    %c0_10 = arith.constant 0 : index
    %10 = vector.load %arg4[%c0_8, %c0_9, %c0_10] : memref<4x32x32xf32, #tpu.memory_space<vmem>>, vector<1x32x32xf32>
    %11 = vector.shape_cast %10 : vector<1x32x32xf32> to vector<32x32xf32>
    %cst = arith.constant dense<0.000000e+00> : vector<32x128xf32>
    %12 = tpu.matmul %11, %8, %cst {dimension_numbers = #tpu.dot_dimension_numbers<[1], [0], [0], [1], [0, 0, 1, 1], [], []>} : vector<32x32xf32>, vector<32x128xf32>, vector<32x128xf32> -> vector<32x128xf32>
    %13 = vector.extract_strided_slice %9 {offsets = [0, 0, 0], sizes = [1, 32, 1], strides = [1, 1, 1]} : vector<4x32x1xf32> to vector<1x32x1xf32>
    %14 = vector.shape_cast %13 : vector<1x32x1xf32> to vector<32x1xf32>
    %15 = vector.broadcast %14 : vector<32x1xf32> to vector<32x128xf32>
    %16 = arith.addf %12, %15 : vector<32x128xf32>
    %17 = math.tanh %16 : vector<32x128xf32>
    %c1 = arith.constant 1 : index
    %c0_11 = arith.constant 0 : index
    %c0_12 = arith.constant 0 : index
    %18 = vector.load %arg4[%c1, %c0_11, %c0_12] : memref<4x32x32xf32, #tpu.memory_space<vmem>>, vector<1x32x32xf32>
    %19 = vector.shape_cast %18 : vector<1x32x32xf32> to vector<32x32xf32>
    %cst_13 = arith.constant dense<0.000000e+00> : vector<32x128xf32>
    %20 = tpu.matmul %19, %17, %cst_13 {dimension_numbers = #tpu.dot_dimension_numbers<[1], [0], [0], [1], [0, 0, 1, 1], [], []>} : vector<32x32xf32>, vector<32x128xf32>, vector<32x128xf32> -> vector<32x128xf32>
    %21 = vector.extract_strided_slice %9 {offsets = [1, 0, 0], sizes = [1, 32, 1], strides = [1, 1, 1]} : vector<4x32x1xf32> to vector<1x32x1xf32>
    %22 = vector.shape_cast %21 : vector<1x32x1xf32> to vector<32x1xf32>
    %23 = vector.broadcast %22 : vector<32x1xf32> to vector<32x128xf32>
    %24 = arith.addf %20, %23 : vector<32x128xf32>
    %25 = math.tanh %24 : vector<32x128xf32>
    %c2 = arith.constant 2 : index
    %c0_14 = arith.constant 0 : index
    %c0_15 = arith.constant 0 : index
    %26 = vector.load %arg4[%c2, %c0_14, %c0_15] : memref<4x32x32xf32, #tpu.memory_space<vmem>>, vector<1x32x32xf32>
    %27 = vector.shape_cast %26 : vector<1x32x32xf32> to vector<32x32xf32>
    %cst_16 = arith.constant dense<0.000000e+00> : vector<32x128xf32>
    %28 = tpu.matmul %27, %25, %cst_16 {dimension_numbers = #tpu.dot_dimension_numbers<[1], [0], [0], [1], [0, 0, 1, 1], [], []>} : vector<32x32xf32>, vector<32x128xf32>, vector<32x128xf32> -> vector<32x128xf32>
    %29 = vector.extract_strided_slice %9 {offsets = [2, 0, 0], sizes = [1, 32, 1], strides = [1, 1, 1]} : vector<4x32x1xf32> to vector<1x32x1xf32>
    %30 = vector.shape_cast %29 : vector<1x32x1xf32> to vector<32x1xf32>
    %31 = vector.broadcast %30 : vector<32x1xf32> to vector<32x128xf32>
    %32 = arith.addf %28, %31 : vector<32x128xf32>
    %33 = math.tanh %32 : vector<32x128xf32>
    %c3 = arith.constant 3 : index
    %c0_17 = arith.constant 0 : index
    %c0_18 = arith.constant 0 : index
    %34 = vector.load %arg4[%c3, %c0_17, %c0_18] : memref<4x32x32xf32, #tpu.memory_space<vmem>>, vector<1x32x32xf32>
    %35 = vector.shape_cast %34 : vector<1x32x32xf32> to vector<32x32xf32>
    %cst_19 = arith.constant dense<0.000000e+00> : vector<32x128xf32>
    %36 = tpu.matmul %35, %33, %cst_19 {dimension_numbers = #tpu.dot_dimension_numbers<[1], [0], [0], [1], [0, 0, 1, 1], [], []>} : vector<32x32xf32>, vector<32x128xf32>, vector<32x128xf32> -> vector<32x128xf32>
    %37 = vector.extract_strided_slice %9 {offsets = [3, 0, 0], sizes = [1, 32, 1], strides = [1, 1, 1]} : vector<4x32x1xf32> to vector<1x32x1xf32>
    %38 = vector.shape_cast %37 : vector<1x32x1xf32> to vector<32x1xf32>
    %39 = vector.broadcast %38 : vector<32x1xf32> to vector<32x128xf32>
    %40 = arith.addf %36, %39 : vector<32x128xf32>
    %41 = math.tanh %40 : vector<32x128xf32>
    %c0_20 = arith.constant 0 : index
    %c0_21 = arith.constant 0 : index
    %42 = vector.load %arg6[%c0_20, %c0_21] : memref<32x1xf32, #tpu.memory_space<vmem>>, vector<32x1xf32>
    %43 = vector.broadcast %42 : vector<32x1xf32> to vector<32x128xf32>
    %44 = arith.mulf %43, %41 : vector<32x128xf32>
    %cst_22 = arith.constant dense<0.000000e+00> : vector<128xf32>
    %45 = vector.multi_reduction <add>, %44, %cst_22 [0] : vector<32x128xf32> to vector<128xf32>
    %46 = vector.shape_cast %45 : vector<128xf32> to vector<1x128xf32>
    %c0_23 = arith.constant 0 : index
    %c0_24 = arith.constant 0 : index
    %47 = vector.load %arg7[%c0_23, %c0_24] : memref<1x1xf32, #tpu.memory_space<vmem>>, vector<1x1xf32>
    %48 = vector.broadcast %47 : vector<1x1xf32> to vector<1x128xf32>
    %49 = arith.addf %46, %48 : vector<1x128xf32>
    %c0_25 = arith.constant 0 : index
    %c0_26 = arith.constant 0 : index
    %50 = vector.load %arg8[%c0_25, %c0_26] : memref<1x128xf32, #tpu.memory_space<vmem>>, vector<1x128xf32>
    tpu.vector_store %arg8[%c0_25, %c0_26], %49 {strides = array<i32>} : memref<1x128xf32, #tpu.memory_space<vmem>>, vector<1x128xf32>,
    return
  }
  func.func @transform_0(%arg0: i32) -> (i32, i32) {
    %c0_i32 = arith.constant 0 : i32
    %c0_i32_0 = arith.constant 0 : i32
    return %c0_i32, %arg0 : i32, i32
  }
  func.func @transform_1(%arg0: i32) -> (i32, i32) {
    %c0_i32 = arith.constant 0 : i32
    %c0_i32_0 = arith.constant 0 : i32
    %c0_i32_1 = arith.constant 0 : i32
    return %c0_i32, %c0_i32_0 : i32, i32
  }
  func.func @transform_2(%arg0: i32) -> (i32, i32) {
    %c0_i32 = arith.constant 0 : i32
    %c0_i32_0 = arith.constant 0 : i32
    %c0_i32_1 = arith.constant 0 : i32
    return %c0_i32, %c0_i32_0 : i32, i32
  }
  func.func @transform_3(%arg0: i32) -> (i32, i32, i32) {
    %c0_i32 = arith.constant 0 : i32
    %c0_i32_0 = arith.constant 0 : i32
    %c0_i32_1 = arith.constant 0 : i32
    %c0_i32_2 = arith.constant 0 : i32
    return %c0_i32, %c0_i32_0, %c0_i32_1 : i32, i32, i32
  }
  func.func @transform_4(%arg0: i32) -> (i32, i32, i32) {
    %c0_i32 = arith.constant 0 : i32
    %c0_i32_0 = arith.constant 0 : i32
    %c0_i32_1 = arith.constant 0 : i32
    %c0_i32_2 = arith.constant 0 : i32
    return %c0_i32, %c0_i32_0, %c0_i32_1 : i32, i32, i32
  }
  func.func @transform_5(%arg0: i32) -> (i32, i32) {
    %c0_i32 = arith.constant 0 : i32
    %c0_i32_0 = arith.constant 0 : i32
    %c0_i32_1 = arith.constant 0 : i32
    return %c0_i32, %c0_i32_0 : i32, i32
  }
  func.func @transform_6(%arg0: i32) -> (i32, i32) {
    %c0_i32 = arith.constant 0 : i32
    %c0_i32_0 = arith.constant 0 : i32
    %c0_i32_1 = arith.constant 0 : i32
    return %c0_i32, %c0_i32_0 : i32, i32
  }
  func.func @transform_7(%arg0: i32) -> (i32, i32) {
    %c0_i32 = arith.constant 0 : i32
    %c0_i32_0 = arith.constant 0 : i32
    return %c0_i32, %arg0 : i32, i32
  }
}

</mosaic_0001>

<llo_original>
// kernel: tpu_custom_call.1
$region0: #{tpu_custom_call.1}
  #allocation0 [shape = 'u32[]', space=smem, size = 0x4, offset = 0x4, fixed_abs, tag = 'smem constant byte address 0x4 - core index']
  #allocation1 [shape = 'u32[144,128]{1,0:T(1,128)}', space=vmem, size = 0x12000, scoped, tag = 'internal scratch']
  #allocation2 [shape = 'f32[1,1]{1,0:T(1,128)S(1)}', space=vmem, size = 0x200, scoped, tag = 'scoped memory for tpu_custom_call.1']
  %s0 = inlined_call_operand.vmem [shape: f32[1,128], index: 0, kind: input, shape index: {}]
  %s1 = inlined_call_operand.vmem [shape: f32[32,1], index: 1, kind: input, shape index: {}]
  %s2 = inlined_call_operand.vmem [shape: f32[32,1], index: 2, kind: input, shape index: {}]
  %s3 = inlined_call_operand.vmem [shape: f32[4,32,32], index: 3, kind: input, shape index: {}]
  %s4 = inlined_call_operand.vmem [shape: f32[4,32,1], index: 4, kind: input, shape index: {}]
  %s5 = inlined_call_operand.vmem [shape: f32[32,1], index: 5, kind: input, shape index: {}]
  %s6 = inlined_call_operand.<no memory space> [shape: f32[1,1], index: 6, kind: input, shape index: {}]
  %s7 = inlined_call_operand.hbm [shape: f32[1,128], index: 7, kind: output, shape index: {}]
  %s8 = sld [smem:[#allocation0]]
  $region38: #{tpu_custom_call.1} parent=0
    _
  %s10 = ssub.s32 1, %s8
  %s11 = scalar_select 0, %s10, %s8
  %v12 = vstv %s6
  %13 = vst [vmem:[#allocation2] sm:$0x1] %v12
  $region1: #{tpu_custom_call.1} parent=0
    #allocation3 [shape = 'u8[512]{0}', space=vmem, size = 0x400, scoped, tag = 'output window, operand 0, single buffered']
    #allocation4 [shape = 's32[1]{0}', space=sflag, size = 0x4, scoped, tag = 'scoped memory for tpu_custom_call.1']
    %14 = vsyncpa [#allocation4], 0
    // Predicated region
    $region2: #{tpu_custom_call.1} parent=1 // pred_check
      _
    $region3: #{tpu_custom_call.1} parent=1 // pred_check_branch
      %16 = sbr.rel (0) target = $region5
    $region4: #{tpu_custom_call.1} parent=1 // pred_region
      _
    $region5: #{tpu_custom_call.1} parent=1 // pred_fallthru
      _
    // Predicated region
    $region6: #{tpu_custom_call.1} parent=1 // pred_check
      _
    $region7: #{tpu_custom_call.1} parent=1 // pred_check_branch
      %18 = sbr.rel (0) target = $region9
    $region8: #{tpu_custom_call.1} parent=1 // pred_region
      _
    $region9: #{tpu_custom_call.1} parent=1 // pred_fallthru
      _
    // Predicated region
    $region10: #{tpu_custom_call.1} parent=1 // pred_check
      _
    $region11: #{tpu_custom_call.1} parent=1 // pred_check_branch
      %20 = sbr.rel (0) target = $region13
    $region12: #{tpu_custom_call.1} parent=1 // pred_region
      _
    $region13: #{tpu_custom_call.1} parent=1 // pred_fallthru
      _
    // Predicated region
    $region14: #{tpu_custom_call.1} parent=1 // pred_check
      _
    $region15: #{tpu_custom_call.1} parent=1 // pred_check_branch
      %22 = sbr.rel (0) target = $region17
    $region16: #{tpu_custom_call.1} parent=1 // pred_region
      _
    $region17: #{tpu_custom_call.1} parent=1 // pred_fallthru
      _
    // Predicated region
    $region18: #{tpu_custom_call.1} parent=1 // pred_check
      _
    $region19: #{tpu_custom_call.1} parent=1 // pred_check_branch
      %24 = sbr.rel (0) target = $region21
    $region20: #{tpu_custom_call.1} parent=1 // pred_region
      _
    $region21: #{tpu_custom_call.1} parent=1 // pred_fallthru
      _
    // Predicated region
    $region22: #{tpu_custom_call.1} parent=1 // pred_check
      _
    $region23: #{tpu_custom_call.1} parent=1 // pred_check_branch
      %26 = sbr.rel (0) target = $region25
    $region24: #{tpu_custom_call.1} parent=1 // pred_region
      _
    $region25: #{tpu_custom_call.1} parent=1 // pred_fallthru
      _
    // Predicated region
    $region26: #{tpu_custom_call.1} parent=1 // pred_check
      _
    $region27: #{tpu_custom_call.1} parent=1 // pred_check_branch
      %28 = sbr.rel (0) target = $region29
    $region28: #{tpu_custom_call.1} parent=1 // pred_region
      _
    $region29: #{tpu_custom_call.1} parent=1 // pred_fallthru
      _
    %v29 = vld [vmem:[%s0] sm:$0x1]
    %v30 = vld [vmem:[%s1] sm:$0xff]
    %v31 = vld [vmem:[%s1 + $0x8] sm:$0xff]
    %v32 = vld [vmem:[%s1 + $0x10] sm:$0xff]
    %v33 = vld [vmem:[%s1 + $0x18] sm:$0xff]
    %35 = vset.pattern.permute.xlu0 0
    %36 = vperm.xlu0 %35, %v30
    %v37 = vpop.permute.xlu0 %36
    %40 = vset.pattern.permute.xlu0 0
    %41 = vperm.xlu0 %40, %v31
    %v42 = vpop.permute.xlu0 %41
    %45 = vset.pattern.permute.xlu0 0
    %46 = vperm.xlu0 %45, %v32
    %v47 = vpop.permute.xlu0 %46
    %50 = vset.pattern.permute.xlu0 0
    %51 = vperm.xlu0 %50, %v33
    %v52 = vpop.permute.xlu0 %51
    %v55 = vlaneseq
    %v56 = vshrl.u32 %v55, 7
    %v57 = vsub.s32 0, %v56
    %v58 = vrot.slane %v29, %v57
    %v60 = vmul.f32 %v37, %v58
    %v61 = vmul.f32 %v42, %v58
    %v62 = vmul.f32 %v47, %v58
    %v63 = vmul.f32 %v52, %v58
    %v64 = vld [vmem:[%s2] sm:$0xff]
    %v65 = vld [vmem:[%s2 + $0x8] sm:$0xff]
    %v66 = vld [vmem:[%s2 + $0x10] sm:$0xff]
    %v67 = vld [vmem:[%s2 + $0x18] sm:$0xff]
    %69 = vset.pattern.permute.xlu0 0
    %70 = vperm.xlu0 %69, %v64
    %v71 = vpop.permute.xlu0 %70
    %74 = vset.pattern.permute.xlu0 0
    %75 = vperm.xlu0 %74, %v65
    %v76 = vpop.permute.xlu0 %75
    %79 = vset.pattern.permute.xlu0 0
    %80 = vperm.xlu0 %79, %v66
    %v81 = vpop.permute.xlu0 %80
    %84 = vset.pattern.permute.xlu0 0
    %85 = vperm.xlu0 %84, %v67
    %v86 = vpop.permute.xlu0 %85
    %v88 = vadd.f32 %v60, %v71
    %v89 = vadd.f32 %v61, %v76
    %v90 = vadd.f32 %v62, %v81
    %v91 = vadd.f32 %v63, %v86
    %v92 = vtanh.pop %v88
    %v93 = vtanh.pop %v89
    %v94 = vtanh.pop %v90
    %v95 = vtanh.pop %v91
    %v96 = vld [vmem:[%s4] sm:$0xff]
    %v97 = vld [vmem:[%s4 + $0x8] sm:$0xff]
    %v98 = vld [vmem:[%s4 + $0x10] sm:$0xff]
    %v99 = vld [vmem:[%s4 + $0x18] sm:$0xff]
    %v100 = vld [vmem:[%s4 + $0x20] sm:$0xff]
    %v101 = vld [vmem:[%s4 + $0x28] sm:$0xff]
    %v102 = vld [vmem:[%s4 + $0x30] sm:$0xff]
    %v103 = vld [vmem:[%s4 + $0x38] sm:$0xff]
    %v104 = vld [vmem:[%s4 + $0x40] sm:$0xff]
    %v105 = vld [vmem:[%s4 + $0x48] sm:$0xff]
    %v106 = vld [vmem:[%s4 + $0x50] sm:$0xff]
    %v107 = vld [vmem:[%s4 + $0x58] sm:$0xff]
    %v108 = vld [vmem:[%s4 + $0x60] sm:$0xff]
    %v109 = vld [vmem:[%s4 + $0x68] sm:$0xff]
    %v110 = vld [vmem:[%s4 + $0x70] sm:$0xff]
    %v111 = vld [vmem:[%s4 + $0x78] sm:$0xff]
    %v112 = vld [vmem:[%s3] sm:$0xff]
    %v113 = vld [vmem:[%s3 + $0x8] sm:$0xff]
    %v114 = vld [vmem:[%s3 + $0x10] sm:$0xff]
    %v115 = vld [vmem:[%s3 + $0x18] sm:$0xff]
    %117 = vset.pattern.permute.xlu0 0
    %118 = vperm.xlu0 %117, %v96
    %v119 = vpop.permute.xlu0 %118
    %122 = vset.pattern.permute.xlu0 0
    %123 = vperm.xlu0 %122, %v97
    %v124 = vpop.permute.xlu0 %123
    %127 = vset.pattern.permute.xlu0 0
    %128 = vperm.xlu0 %127, %v98
    %v129 = vpop.permute.xlu0 %128
    %132 = vset.pattern.permute.xlu0 0
    %133 = vperm.xlu0 %132, %v99
    %v134 = vpop.permute.xlu0 %133
    %vm136 = vcmask 261120
    %v138 = vsel %vm136, %v112, 0
    %v141 = vsel %vm136, %v113, 0
    %v144 = vsel %vm136, %v114, 0
    %v147 = vsel %vm136, %v115, 0
    %149 = vmatprep.subr.mxu0 0.0
    %150 = vmatpush1.msra.mxu0 0.0
    %151 = vmatprep.subr.mxu0 0.0
    %152 = vmatpush1.msra.mxu0 0.0
    %153 = vmatprep.subr.mxu0 0.0
    %154 = vmatpush1.msra.mxu0 0.0
    %155 = vmatprep.subr.mxu0 0.0
    %156 = vmatpush1.msra.mxu0 0.0
    %157 = vmatprep.subr.mxu0 0.0
    %158 = vmatpush1.msra.mxu0 0.0
    %159 = vmatprep.subr.mxu0 0.0
    %160 = vmatpush1.msra.mxu0 0.0
    %161 = vmatprep.subr.mxu0 0.0
    %162 = vmatpush1.msra.mxu0 0.0
    %163 = vmatprep.subr.mxu0 0.0
    %164 = vmatpush1.msra.mxu0 0.0
    %165 = vmatprep.subr.mxu0 0.0
    %166 = vmatpush1.msra.mxu0 0.0
    %167 = vmatprep.subr.mxu0 0.0
    %168 = vmatpush1.msra.mxu0 0.0
    %169 = vmatprep.subr.mxu0 0.0
    %170 = vmatpush1.msra.mxu0 0.0
    %171 = vmatprep.subr.mxu0 0.0
    %172 = vmatpush1.msra.mxu0 0.0
    %173 = vmatprep.subr.mxu0 0.0
    %174 = vmatpush1.msra.mxu0 %v95
    %175 = vmatprep.subr.mxu0 0.0
    %176 = vmatpush1.msra.mxu0 %v94
    %177 = vmatprep.subr.mxu0 0.0
    %178 = vmatpush1.msra.mxu0 %v93
    %179 = vmatprep.subr.mxu0 0.0
    %180 = vmatpush1.msra.mxu0 %v92
    %181 = vmatprep.subr.mxu0 0.0
    %182 = vmatpush2.msra.mxu0 0.0
    %183 = vmatprep.subr.mxu0 0.0
    %184 = vmatpush2.msra.mxu0 0.0
    %185 = vmatprep.subr.mxu0 0.0
    %186 = vmatpush2.msra.mxu0 0.0
    %187 = vmatprep.subr.mxu0 0.0
    %188 = vmatpush2.msra.mxu0 0.0
    %189 = vmatprep.subr.mxu0 0.0
    %190 = vmatpush2.msra.mxu0 0.0
    %191 = vmatprep.subr.mxu0 0.0
    %192 = vmatpush2.msra.mxu0 0.0
    %193 = vmatprep.subr.mxu0 0.0
    %194 = vmatpush2.msra.mxu0 0.0
    %195 = vmatprep.subr.mxu0 0.0
    %196 = vmatpush2.msra.mxu0 0.0
    %197 = vmatprep.subr.mxu0 0.0
    %198 = vmatpush2.msra.mxu0 0.0
    %199 = vmatprep.subr.mxu0 0.0
    %200 = vmatpush2.msra.mxu0 0.0
    %201 = vmatprep.subr.mxu0 0.0
    %202 = vmatpush2.msra.mxu0 0.0
    %203 = vmatprep.subr.mxu0 0.0
    %204 = vmatpush2.msra.mxu0 0.0
    %205 = vmatprep.subr.mxu0 0.0
    %206 = vmatpush2.msra.mxu0 0.0
    %207 = vmatprep.subr.mxu0 0.0
    %208 = vmatpush2.msra.mxu0 0.0
    %209 = vmatprep.subr.mxu0 0.0
    %210 = vmatpush2.msra.mxu0 0.0
    %211 = vmatprep.subr.mxu0 0.0
    %212 = vmatpush2.msra.mxu0 0.0
    %213 = vmatprep.mubr.f32.mxu0 0.0
    %214 = vmatmul.mubr.f32.gmra.mxu0 %v138
    %v215 = vpop.f32.mrf.mxu0
    %v216 = vadd.f32 %v119, %v215
    %v217 = vpop.f32.mrf.mxu0
    %218 = vmatprep.mubr.f32.mxu0 0.0
    %219 = vmatmul.mubr.f32.gmra.mxu0 %v141
    %v220 = vpop.f32.mrf.mxu0
    %v221 = vadd.f32 %v124, %v220
    %v222 = vpop.f32.mrf.mxu0
    %223 = vmatprep.mubr.f32.mxu0 0.0
    %224 = vmatmul.mubr.f32.gmra.mxu0 %v144
    %v225 = vpop.f32.mrf.mxu0
    %v226 = vadd.f32 %v129, %v225
    %v227 = vpop.f32.mrf.mxu0
    %228 = vmatprep.mubr.f32.mxu0 0.0
    %229 = vmatmul.mubr.f32.gmra.mxu0 %v147
    %v230 = vpop.f32.mrf.mxu0
    %v231 = vadd.f32 %v134, %v230
    %v232 = vpop.f32.mrf.mxu0
    %233 = vdwg.mxu0
    %v234 = vtanh.pop %v216
    %v235 = vtanh.pop %v221
    %v236 = vtanh.pop %v226
    %v237 = vtanh.pop %v231
    %s238 = scalar_lea.vmem %s3, 32
    %v239 = vld [vmem:[%s238] sm:$0xff]
    %v240 = vld [vmem:[%s238 + $0x8] sm:$0xff]
    %v241 = vld [vmem:[%s238 + $0x10] sm:$0xff]
    %v242 = vld [vmem:[%s238 + $0x18] sm:$0xff]
    %244 = vset.pattern.permute.xlu0 0
    %245 = vperm.xlu0 %244, %v100
    %v246 = vpop.permute.xlu0 %245
    %249 = vset.pattern.permute.xlu0 0
    %250 = vperm.xlu0 %249, %v101
    %v251 = vpop.permute.xlu0 %250
    %254 = vset.pattern.permute.xlu0 0
    %255 = vperm.xlu0 %254, %v102
    %v256 = vpop.permute.xlu0 %255
    %259 = vset.pattern.permute.xlu0 0
    %260 = vperm.xlu0 %259, %v103
    %v261 = vpop.permute.xlu0 %260
    %v264 = vsel %vm136, %v239, 0
    %v267 = vsel %vm136, %v240, 0
    %v270 = vsel %vm136, %v241, 0
    %v273 = vsel %vm136, %v242, 0
    %275 = vmatprep.subr.mxu0 0.0
    %276 = vmatpush1.msra.mxu0 0.0
    %277 = vmatprep.subr.mxu0 0.0
    %278 = vmatpush1.msra.mxu0 0.0
    %279 = vmatprep.subr.mxu0 0.0
    %280 = vmatpush1.msra.mxu0 0.0
    %281 = vmatprep.subr.mxu0 0.0
    %282 = vmatpush1.msra.mxu0 0.0
    %283 = vmatprep.subr.mxu0 0.0
    %284 = vmatpush1.msra.mxu0 0.0
    %285 = vmatprep.subr.mxu0 0.0
    %286 = vmatpush1.msra.mxu0 0.0
    %287 = vmatprep.subr.mxu0 0.0
    %288 = vmatpush1.msra.mxu0 0.0
    %289 = vmatprep.subr.mxu0 0.0
    %290 = vmatpush1.msra.mxu0 0.0
    %291 = vmatprep.subr.mxu0 0.0
    %292 = vmatpush1.msra.mxu0 0.0
    %293 = vmatprep.subr.mxu0 0.0
    %294 = vmatpush1.msra.mxu0 0.0
    %295 = vmatprep.subr.mxu0 0.0
    %296 = vmatpush1.msra.mxu0 0.0
    %297 = vmatprep.subr.mxu0 0.0
    %298 = vmatpush1.msra.mxu0 0.0
    %299 = vmatprep.subr.mxu0 0.0
    %300 = vmatpush1.msra.mxu0 %v237
    %301 = vmatprep.subr.mxu0 0.0
    %302 = vmatpush1.msra.mxu0 %v236
    %303 = vmatprep.subr.mxu0 0.0
    %304 = vmatpush1.msra.mxu0 %v235
    %305 = vmatprep.subr.mxu0 0.0
    %306 = vmatpush1.msra.mxu0 %v234
    %307 = vmatprep.subr.mxu0 0.0
    %308 = vmatpush2.msra.mxu0 0.0
    %309 = vmatprep.subr.mxu0 0.0
    %310 = vmatpush2.msra.mxu0 0.0
    %311 = vmatprep.subr.mxu0 0.0
    %312 = vmatpush2.msra.mxu0 0.0
    %313 = vmatprep.subr.mxu0 0.0
    %314 = vmatpush2.msra.mxu0 0.0
    %315 = vmatprep.subr.mxu0 0.0
    %316 = vmatpush2.msra.mxu0 0.0
    %317 = vmatprep.subr.mxu0 0.0
    %318 = vmatpush2.msra.mxu0 0.0
    %319 = vmatprep.subr.mxu0 0.0
    %320 = vmatpush2.msra.mxu0 0.0
    %321 = vmatprep.subr.mxu0 0.0
    %322 = vmatpush2.msra.mxu0 0.0
    %323 = vmatprep.subr.mxu0 0.0
    %324 = vmatpush2.msra.mxu0 0.0
    %325 = vmatprep.subr.mxu0 0.0
    %326 = vmatpush2.msra.mxu0 0.0
    %327 = vmatprep.subr.mxu0 0.0
    %328 = vmatpush2.msra.mxu0 0.0
    %329 = vmatprep.subr.mxu0 0.0
    %330 = vmatpush2.msra.mxu0 0.0
    %331 = vmatprep.subr.mxu0 0.0
    %332 = vmatpush2.msra.mxu0 0.0
    %333 = vmatprep.subr.mxu0 0.0
    %334 = vmatpush2.msra.mxu0 0.0
    %335 = vmatprep.subr.mxu0 0.0
    %336 = vmatpush2.msra.mxu0 0.0
    %337 = vmatprep.subr.mxu0 0.0
    %338 = vmatpush2.msra.mxu0 0.0
    %339 = vmatprep.mubr.f32.mxu0 0.0
    %340 = vmatmul.mubr.f32.gmra.mxu0 %v264
    %v341 = vpop.f32.mrf.mxu0
    %v342 = vadd.f32 %v246, %v341
    %v343 = vpop.f32.mrf.mxu0
    %344 = vmatprep.mubr.f32.mxu0 0.0
    %345 = vmatmul.mubr.f32.gmra.mxu0 %v267
    %v346 = vpop.f32.mrf.mxu0
    %v347 = vadd.f32 %v251, %v346
    %v348 = vpop.f32.mrf.mxu0
    %349 = vmatprep.mubr.f32.mxu0 0.0
    %350 = vmatmul.mubr.f32.gmra.mxu0 %v270
    %v351 = vpop.f32.mrf.mxu0
    %v352 = vadd.f32 %v256, %v351
    %v353 = vpop.f32.mrf.mxu0
    %354 = vmatprep.mubr.f32.mxu0 0.0
    %355 = vmatmul.mubr.f32.gmra.mxu0 %v273
    %v356 = vpop.f32.mrf.mxu0
    %v357 = vadd.f32 %v261, %v356
    %v358 = vpop.f32.mrf.mxu0
    %359 = vdwg.mxu0
    %v360 = vtanh.pop %v342
    %v361 = vtanh.pop %v347
    %v362 = vtanh.pop %v352
    %v363 = vtanh.pop %v357
    %s364 = scalar_lea.vmem %s3, 64
    %v365 = vld [vmem:[%s364] sm:$0xff]
    %v366 = vld [vmem:[%s364 + $0x8] sm:$0xff]
    %v367 = vld [vmem:[%s364 + $0x10] sm:$0xff]
    %v368 = vld [vmem:[%s364 + $0x18] sm:$0xff]
    %370 = vset.pattern.permute.xlu0 0
    %371 = vperm.xlu0 %370, %v104
    %v372 = vpop.permute.xlu0 %371
    %375 = vset.pattern.permute.xlu0 0
    %376 = vperm.xlu0 %375, %v105
    %v377 = vpop.permute.xlu0 %376
    %380 = vset.pattern.permute.xlu0 0
    %381 = vperm.xlu0 %380, %v106
    %v382 = vpop.permute.xlu0 %381
    %385 = vset.pattern.permute.xlu0 0
    %386 = vperm.xlu0 %385, %v107
    %v387 = vpop.permute.xlu0 %386
    %v390 = vsel %vm136, %v365, 0
    %v393 = vsel %vm136, %v366, 0
    %v396 = vsel %vm136, %v367, 0
    %v399 = vsel %vm136, %v368, 0
    %401 = vmatprep.subr.mxu0 0.0
    %402 = vmatpush1.msra.mxu0 0.0
    %403 = vmatprep.subr.mxu0 0.0
    %404 = vmatpush1.msra.mxu0 0.0
    %405 = vmatprep.subr.mxu0 0.0
    %406 = vmatpush1.msra.mxu0 0.0
    %407 = vmatprep.subr.mxu0 0.0
    %408 = vmatpush1.msra.mxu0 0.0
    %409 = vmatprep.subr.mxu0 0.0
    %410 = vmatpush1.msra.mxu0 0.0
    %411 = vmatprep.subr.mxu0 0.0
    %412 = vmatpush1.msra.mxu0 0.0
    %413 = vmatprep.subr.mxu0 0.0
    %414 = vmatpush1.msra.mxu0 0.0
    %415 = vmatprep.subr.mxu0 0.0
    %416 = vmatpush1.msra.mxu0 0.0
    %417 = vmatprep.subr.mxu0 0.0
    %418 = vmatpush1.msra.mxu0 0.0
    %419 = vmatprep.subr.mxu0 0.0
    %420 = vmatpush1.msra.mxu0 0.0
    %421 = vmatprep.subr.mxu0 0.0
    %422 = vmatpush1.msra.mxu0 0.0
    %423 = vmatprep.subr.mxu0 0.0
    %424 = vmatpush1.msra.mxu0 0.0
    %425 = vmatprep.subr.mxu0 0.0
    %426 = vmatpush1.msra.mxu0 %v363
    %427 = vmatprep.subr.mxu0 0.0
    %428 = vmatpush1.msra.mxu0 %v362
    %429 = vmatprep.subr.mxu0 0.0
    %430 = vmatpush1.msra.mxu0 %v361
    %431 = vmatprep.subr.mxu0 0.0
    %432 = vmatpush1.msra.mxu0 %v360
    %433 = vmatprep.subr.mxu0 0.0
    %434 = vmatpush2.msra.mxu0 0.0
    %435 = vmatprep.subr.mxu0 0.0
    %436 = vmatpush2.msra.mxu0 0.0
    %437 = vmatprep.subr.mxu0 0.0
    %438 = vmatpush2.msra.mxu0 0.0
    %439 = vmatprep.subr.mxu0 0.0
    %440 = vmatpush2.msra.mxu0 0.0
    %441 = vmatprep.subr.mxu0 0.0
    %442 = vmatpush2.msra.mxu0 0.0
    %443 = vmatprep.subr.mxu0 0.0
    %444 = vmatpush2.msra.mxu0 0.0
    %445 = vmatprep.subr.mxu0 0.0
    %446 = vmatpush2.msra.mxu0 0.0
    %447 = vmatprep.subr.mxu0 0.0
    %448 = vmatpush2.msra.mxu0 0.0
    %449 = vmatprep.subr.mxu0 0.0
    %450 = vmatpush2.msra.mxu0 0.0
    %451 = vmatprep.subr.mxu0 0.0
    %452 = vmatpush2.msra.mxu0 0.0
    %453 = vmatprep.subr.mxu0 0.0
    %454 = vmatpush2.msra.mxu0 0.0
    %455 = vmatprep.subr.mxu0 0.0
    %456 = vmatpush2.msra.mxu0 0.0
    %457 = vmatprep.subr.mxu0 0.0
    %458 = vmatpush2.msra.mxu0 0.0
    %459 = vmatprep.subr.mxu0 0.0
    %460 = vmatpush2.msra.mxu0 0.0
    %461 = vmatprep.subr.mxu0 0.0
    %462 = vmatpush2.msra.mxu0 0.0
    %463 = vmatprep.subr.mxu0 0.0
    %464 = vmatpush2.msra.mxu0 0.0
    %465 = vmatprep.mubr.f32.mxu0 0.0
    %466 = vmatmul.mubr.f32.gmra.mxu0 %v390
    %v467 = vpop.f32.mrf.mxu0
    %v468 = vadd.f32 %v372, %v467
    %v469 = vpop.f32.mrf.mxu0
    %470 = vmatprep.mubr.f32.mxu0 0.0
    %471 = vmatmul.mubr.f32.gmra.mxu0 %v393
    %v472 = vpop.f32.mrf.mxu0
    %v473 = vadd.f32 %v377, %v472
    %v474 = vpop.f32.mrf.mxu0
    %475 = vmatprep.mubr.f32.mxu0 0.0
    %476 = vmatmul.mubr.f32.gmra.mxu0 %v396
    %v477 = vpop.f32.mrf.mxu0
    %v478 = vadd.f32 %v382, %v477
    %v479 = vpop.f32.mrf.mxu0
    %480 = vmatprep.mubr.f32.mxu0 0.0
    %481 = vmatmul.mubr.f32.gmra.mxu0 %v399
    %v482 = vpop.f32.mrf.mxu0
    %v483 = vadd.f32 %v387, %v482
    %v484 = vpop.f32.mrf.mxu0
    %485 = vdwg.mxu0
    %v486 = vtanh.pop %v468
    %v487 = vtanh.pop %v473
    %v488 = vtanh.pop %v478
    %v489 = vtanh.pop %v483
    %s490 = scalar_lea.vmem %s3, 96
    %v491 = vld [vmem:[%s490] sm:$0xff]
    %v492 = vld [vmem:[%s490 + $0x8] sm:$0xff]
    %v493 = vld [vmem:[%s490 + $0x10] sm:$0xff]
    %v494 = vld [vmem:[%s490 + $0x18] sm:$0xff]
    %496 = vset.pattern.permute.xlu0 0
    %497 = vperm.xlu0 %496, %v108
    %v498 = vpop.permute.xlu0 %497
    %501 = vset.pattern.permute.xlu0 0
    %502 = vperm.xlu0 %501, %v109
    %v503 = vpop.permute.xlu0 %502
    %506 = vset.pattern.permute.xlu0 0
    %507 = vperm.xlu0 %506, %v110
    %v508 = vpop.permute.xlu0 %507
    %511 = vset.pattern.permute.xlu0 0
    %512 = vperm.xlu0 %511, %v111
    %v513 = vpop.permute.xlu0 %512
    %v516 = vsel %vm136, %v491, 0
    %v519 = vsel %vm136, %v492, 0
    %v522 = vsel %vm136, %v493, 0
    %v525 = vsel %vm136, %v494, 0
    %527 = vmatprep.subr.mxu0 0.0
    %528 = vmatpush1.msra.mxu0 0.0
    %529 = vmatprep.subr.mxu0 0.0
    %530 = vmatpush1.msra.mxu0 0.0
    %531 = vmatprep.subr.mxu0 0.0
    %532 = vmatpush1.msra.mxu0 0.0
    %533 = vmatprep.subr.mxu0 0.0
    %534 = vmatpush1.msra.mxu0 0.0
    %535 = vmatprep.subr.mxu0 0.0
    %536 = vmatpush1.msra.mxu0 0.0
    %537 = vmatprep.subr.mxu0 0.0
    %538 = vmatpush1.msra.mxu0 0.0
    %539 = vmatprep.subr.mxu0 0.0
    %540 = vmatpush1.msra.mxu0 0.0
    %541 = vmatprep.subr.mxu0 0.0
    %542 = vmatpush1.msra.mxu0 0.0
    %543 = vmatprep.subr.mxu0 0.0
    %544 = vmatpush1.msra.mxu0 0.0
    %545 = vmatprep.subr.mxu0 0.0
    %546 = vmatpush1.msra.mxu0 0.0
    %547 = vmatprep.subr.mxu0 0.0
    %548 = vmatpush1.msra.mxu0 0.0
    %549 = vmatprep.subr.mxu0 0.0
    %550 = vmatpush1.msra.mxu0 0.0
    %551 = vmatprep.subr.mxu0 0.0
    %552 = vmatpush1.msra.mxu0 %v489
    %553 = vmatprep.subr.mxu0 0.0
    %554 = vmatpush1.msra.mxu0 %v488
    %555 = vmatprep.subr.mxu0 0.0
    %556 = vmatpush1.msra.mxu0 %v487
    %557 = vmatprep.subr.mxu0 0.0
    %558 = vmatpush1.msra.mxu0 %v486
    %559 = vmatprep.subr.mxu0 0.0
    %560 = vmatpush2.msra.mxu0 0.0
    %561 = vmatprep.subr.mxu0 0.0
    %562 = vmatpush2.msra.mxu0 0.0
    %563 = vmatprep.subr.mxu0 0.0
    %564 = vmatpush2.msra.mxu0 0.0
    %565 = vmatprep.subr.mxu0 0.0
    %566 = vmatpush2.msra.mxu0 0.0
    %567 = vmatprep.subr.mxu0 0.0
    %568 = vmatpush2.msra.mxu0 0.0
    %569 = vmatprep.subr.mxu0 0.0
    %570 = vmatpush2.msra.mxu0 0.0
    %571 = vmatprep.subr.mxu0 0.0
    %572 = vmatpush2.msra.mxu0 0.0
    %573 = vmatprep.subr.mxu0 0.0
    %574 = vmatpush2.msra.mxu0 0.0
    %575 = vmatprep.subr.mxu0 0.0
    %576 = vmatpush2.msra.mxu0 0.0
    %577 = vmatprep.subr.mxu0 0.0
    %578 = vmatpush2.msra.mxu0 0.0
    %579 = vmatprep.subr.mxu0 0.0
    %580 = vmatpush2.msra.mxu0 0.0
    %581 = vmatprep.subr.mxu0 0.0
    %582 = vmatpush2.msra.mxu0 0.0
    %583 = vmatprep.subr.mxu0 0.0
    %584 = vmatpush2.msra.mxu0 0.0
    %585 = vmatprep.subr.mxu0 0.0
    %586 = vmatpush2.msra.mxu0 0.0
    %587 = vmatprep.subr.mxu0 0.0
    %588 = vmatpush2.msra.mxu0 0.0
    %589 = vmatprep.subr.mxu0 0.0
    %590 = vmatpush2.msra.mxu0 0.0
    %591 = vmatprep.mubr.f32.mxu0 0.0
    %592 = vmatmul.mubr.f32.gmra.mxu0 %v516
    %v593 = vpop.f32.mrf.mxu0
    %v594 = vadd.f32 %v498, %v593
    %v595 = vpop.f32.mrf.mxu0
    %596 = vmatprep.mubr.f32.mxu0 0.0
    %597 = vmatmul.mubr.f32.gmra.mxu0 %v519
    %v598 = vpop.f32.mrf.mxu0
    %v599 = vadd.f32 %v503, %v598
    %v600 = vpop.f32.mrf.mxu0
    %601 = vmatprep.mubr.f32.mxu0 0.0
    %602 = vmatmul.mubr.f32.gmra.mxu0 %v522
    %v603 = vpop.f32.mrf.mxu0
    %v604 = vadd.f32 %v508, %v603
    %v605 = vpop.f32.mrf.mxu0
    %606 = vmatprep.mubr.f32.mxu0 0.0
    %607 = vmatmul.mubr.f32.gmra.mxu0 %v525
    %v608 = vpop.f32.mrf.mxu0
    %v609 = vadd.f32 %v513, %v608
    %v610 = vpop.f32.mrf.mxu0
    %611 = vdwg.mxu0
    %v612 = vtanh.pop %v594
    %v613 = vtanh.pop %v599
    %v614 = vtanh.pop %v604
    %v615 = vtanh.pop %v609
    %v616 = vld [vmem:[%s5] sm:$0xff]
    %v617 = vld [vmem:[%s5 + $0x8] sm:$0xff]
    %v618 = vld [vmem:[%s5 + $0x10] sm:$0xff]
    %v619 = vld [vmem:[%s5 + $0x18] sm:$0xff]
    %621 = vset.pattern.permute.xlu0 0
    %622 = vperm.xlu0 %621, %v616
    %v623 = vpop.permute.xlu0 %622
    %626 = vset.pattern.permute.xlu0 0
    %627 = vperm.xlu0 %626, %v617
    %v628 = vpop.permute.xlu0 %627
    %631 = vset.pattern.permute.xlu0 0
    %632 = vperm.xlu0 %631, %v618
    %v633 = vpop.permute.xlu0 %632
    %636 = vset.pattern.permute.xlu0 0
    %637 = vperm.xlu0 %636, %v619
    %v638 = vpop.permute.xlu0 %637
    %v640 = vmul.f32 %v623, %v612
    %v641 = vmul.f32 %v628, %v613
    %v642 = vmul.f32 %v633, %v614
    %v643 = vmul.f32 %v638, %v615
    %v644 = vadd.f32 %v640, %v641
    %v645 = vadd.f32 %v644, %v642
    %v646 = vadd.f32 %v645, %v643
    %v647 = vrot.slane %v646, 4
    %v648 = vadd.f32 %v646, %v647
    %v649 = vrot.slane %v648, 2
    %v650 = vadd.f32 %v648, %v649
    %v651 = vrot.slane %v650, 1
    %v652 = vadd.f32 %v650, %v651
    %v653 = vld [vmem:[#allocation2] sm:$0x1]
    %655 = vset.pattern.permute.xlu0 0
    %656 = vperm.xlu0 %655, %v653
    %v657 = vpop.permute.xlu0 %656
    %v659 = vlaneseq
    %v660 = vshrl.u32 %v659, 7
    %v661 = vsub.s32 0, %v660
    %v662 = vrot.slane %v657, %v661
    %v663 = vadd.f32 %v652, %v662
    %664 = vst [vmem:[#allocation3] sm:$0x1] %v663
    // Predicated region
    $region30: #{tpu_custom_call.1} parent=1 // pred_check
      _
    $region31: #{tpu_custom_call.1} parent=1 // pred_check_branch
      %666 = sbr.rel (0) target = $region33
    $region32: #{tpu_custom_call.1} parent=1 // pred_region
      %s668 = ssub.s32 16, 16
      %669 = vsyncadd [#allocation4], %s668
      %s671 = sshll.u32 [#allocation3], 4
      %s672 = int_to_ptr.vmem [resolvable:$true] %s671
      %674 = dma.vmem_to_hbm [thread:$0]  %s672, 16, %s7, [#allocation4]
    $region33: #{tpu_custom_call.1} parent=1 // pred_fallthru
      _
    // Predicated region
    $region34: #{tpu_custom_call.1} parent=1 // pred_check
      _
    $region35: #{tpu_custom_call.1} parent=1 // pred_check_branch
      %676 = sbr.rel (0) target = $region37
    $region36: #{tpu_custom_call.1} parent=1 // pred_region
      %677 = dma.done [#allocation4], 16
    $region37: #{tpu_custom_call.1} parent=1 // pred_fallthru
      _
    %678 = vsyncpa [#allocation4], 1

</llo_original>
